<compile_context>
chip_gen: v6e
topology: v6e:2x2x1
jax: 0.10.0
libtpu: 0.0.40
codegen_flags: <defaults>
</compile_context>

<pallas_src>
import functools
import math

import jax
import jax.numpy as jnp
from jax.experimental import pallas as pl
from jax.experimental.pallas import tpu as pltpu

_LANE = 128


# ----------------------------- per-generation tuning -------------------------

def _tpu_generation() -> str:
    try:
        kind = jax.devices()[0].device_kind.lower()
    except Exception:
        return "unknown"
    for tag in ("v7", "v6", "v5"):
        if tag in kind:
            return tag
    return "unknown"


_GEN = _tpu_generation()
if _GEN == "v7":
    # 3.2 TB/s HBM: large tiles amortize the ~0.35us per-step overhead;
    # v7x VMEM is only 64 MiB so keep the scoped limit <= ~48 MiB.
    _TARGET_TILE_BYTES = 6 * 1024 * 1024
    _VMEM_LIMIT_BYTES = 48 * 1024 * 1024
elif _GEN == "v6":
    _TARGET_TILE_BYTES = 4 * 1024 * 1024
    _VMEM_LIMIT_BYTES = 32 * 1024 * 1024
else:  # v5e / unknown: conservative
    _TARGET_TILE_BYTES = 2 * 1024 * 1024
    _VMEM_LIMIT_BYTES = 32 * 1024 * 1024


# ----------------------------- table construction (plain JAX glue) ----------

def get_abs_position(dim: int, max_len: int) -> jnp.ndarray:
    """Sinusoidal absolute PE table, shape (1, max_len, dim), float32."""
    position = jnp.arange(0, max_len, dtype=jnp.float32)[:, None]          # (L, 1)
    div_term = jnp.exp(
        jnp.arange(0, dim, 2, dtype=jnp.float32) * -(math.log(10000.0) / dim)
    )                                                                       # (dim//2,)
    pe = jnp.zeros((max_len, dim), dtype=jnp.float32)
    pe = pe.at[:, 0::2].set(jnp.sin(position * div_term))
    pe = pe.at[:, 1::2].set(jnp.cos(position * div_term))
    return pe[None]                                                         # (1, L, dim)


# ----------------------------- Pallas kernels --------------------------------

def _scale_kernel(x_ref, o_ref, *, xscale):
    # x_ref/o_ref block: (t_rows, c) lane-dense slab. f32 compute, cast at store.
    o_ref[...] = (x_ref[...].astype(jnp.float32) * xscale).astype(o_ref.dtype)


def _scale_add3d_kernel(x_ref, pe_ref, o_ref, *, xscale):
    # x/o block: (1, t_t, D); pe block: (1, t_t, D) f32. f32 compute, cast at store.
    o_ref[...] = (x_ref[...].astype(jnp.float32) * xscale
                  + pe_ref[...]).astype(o_ref.dtype)


def _scale_add2d_kernel(x_ref, pe_ref, o_ref, *, xscale):
    # x/o block: (t_b, t_c); pe block: (1, t_c) f32, broadcast over sublanes.
    o_ref[...] = (x_ref[...].astype(jnp.float32) * xscale
                  + pe_ref[...]).astype(o_ref.dtype)


# ----------------------------- tiling helpers ---------------------------------

def _round8(v: int) -> int:
    return max(8, (v // 8) * 8)


def _cap_two_steps(tile_rows: int, rows: int) -> int:
    """On v7x, cap the tile so the row-grid has >=2 steps (feed both TensorCores)."""
    if _GEN == "v7" and rows >= 16:
        tile_rows = min(tile_rows, _round8(rows // 2))
    return tile_rows


def _pick_lane_width(n: int):
    """Largest lane width k*128 (k = 16..1) dividing n, else None (masked-store fallback)."""
    for k in range(16, 0, -1):
        c = k * _LANE
        if n % c == 0:
            return c
    return None


def _pick_row_tile(rows: int, cols: int, itemsize: int) -> int:
    """Row tile: multiple of 8 (or full extent) targeting the per-gen tile size."""
    target_rows = max(1, _TARGET_TILE_BYTES // max(1, cols * itemsize))
    target_rows = _cap_two_steps(target_rows, rows)
    if rows <= target_rows:
        return rows                          # full-extent block (exempt from x8 rule)
    return _round8(min(target_rows, rows))


def _pick_time_tile(T: int, D: int, itemsize: int, B: int) -> int:
    """Time tile for the 3-D rope_abs_plus path (8-multiple or full extent)."""
    target_t = max(1, _TARGET_TILE_BYTES // max(1, D * itemsize))
    if B == 1:
        target_t = _cap_two_steps(target_t, T)
    if T <= target_t:
        return T
    return _round8(min(target_t, T))


# ----------------------------- pallas_call wrappers ---------------------------

def _scale_pallas(x: jnp.ndarray, xscale: float) -> jnp.ndarray:
    """out = x * xscale, tiled as large lane-dense row slabs."""
    orig_shape = x.shape
    n = x.size
    itemsize = jnp.dtype(x.dtype).itemsize

    c = _pick_lane_width(n)
    if c is not None:
        x2 = x.reshape(n // c, c)                  # fully flattened, lane-dense
    else:
        x2 = x.reshape(-1, orig_shape[-1])         # fallback: (B*T, D), full-D block
        c = x2.shape[-1]
    rows = x2.shape[0]
    t_r = _pick_row_tile(rows, c, itemsize)

    out2 = pl.pallas_call(
        functools.partial(_scale_kernel, xscale=xscale),
        out_shape=jax.ShapeDtypeStruct(x2.shape, x.dtype),
        grid_spec=pltpu.PrefetchScalarGridSpec(
            num_scalar_prefetch=0,
            grid=(pl.cdiv(rows, t_r),),
            in_specs=[pl.BlockSpec((t_r, c), lambda i: (i, 0))],
            out_specs=pl.BlockSpec((t_r, c), lambda i: (i, 0)),
        ),
        compiler_params=pltpu.CompilerParams(
            dimension_semantics=("parallel",),
            vmem_limit_bytes=_VMEM_LIMIT_BYTES,
        ),
    )(x2)
    return out2.reshape(orig_shape)


def _scale_add_pallas(x: jnp.ndarray, pe_slice: jnp.ndarray, xscale: float) -> jnp.ndarray:
    """out = x * xscale + pe_slice (broadcast over batch). pe stays f32; f32 compute."""
    B, T, D = x.shape
    itemsize = jnp.dtype(x.dtype).itemsize
    pe_f32 = pe_slice.astype(jnp.float32)                # (1, T, D), already f32 normally

    if D % _LANE == 0:
        # ---- 3-D lane+sublane dense tiling; pe block reused across the inner B axis.
        t_t = _pick_time_tile(T, D, itemsize, B)
        grid = (pl.cdiv(T, t_t), B)                      # time OUTER, batch INNER
        out = pl.pallas_call(
            functools.partial(_scale_add3d_kernel, xscale=xscale),
            out_shape=jax.ShapeDtypeStruct((B, T, D), x.dtype),
            grid_spec=pltpu.PrefetchScalarGridSpec(
                num_scalar_prefetch=0,
                grid=grid,
                in_specs=[
                    pl.BlockSpec((1, t_t, D), lambda ti, bi: (bi, ti, 0)),
                    pl.BlockSpec((1, t_t, D), lambda ti, bi: (0, ti, 0)),
                ],
                out_specs=pl.BlockSpec((1, t_t, D), lambda ti, bi: (bi, ti, 0)),
            ),
            compiler_params=pltpu.CompilerParams(
                dimension_semantics=("parallel", "parallel"),
                vmem_limit_bytes=_VMEM_LIMIT_BYTES,
            ),
        )(x, pe_f32)
        return out

    # ---- 2-D fallback: (B, T*D) with 128-multiple (or full-extent) column tiles.
    cols = T * D
    x2 = x.reshape(B, cols)
    pe2 = pe_f32.reshape(1, cols)

    t_b = B if B <= 8 else 8
    if cols <= _LANE:
        t_c = cols                                       # full-extent lanes
    else:
        target_elems = max(_LANE, _TARGET_TILE_BYTES // (itemsize * max(1, t_b)))
        t_c = max(_LANE, (target_elems // _LANE) * _LANE)    # 128-multiple
        t_c = min(t_c, cols)

    # column axis outer, batch axis inner -> pe block index constant across inner steps
    grid = (pl.cdiv(cols, t_c), pl.cdiv(B, t_b))

    out2 = pl.pallas_call(
        functools.partial(_scale_add2d_kernel, xscale=xscale),
        out_shape=jax.ShapeDtypeStruct((B, cols), x.dtype),
        grid_spec=pltpu.PrefetchScalarGridSpec(
            num_scalar_prefetch=0,
            grid=grid,
            in_specs=[
                pl.BlockSpec((t_b, t_c), lambda ci, bi: (bi, ci)),
                pl.BlockSpec((1, t_c), lambda ci, bi: (0, ci)),
            ],
            out_specs=pl.BlockSpec((t_b, t_c), lambda ci, bi: (bi, ci)),
        ),
        compiler_params=pltpu.CompilerParams(
            dimension_semantics=("parallel", "parallel"),
            vmem_limit_bytes=_VMEM_LIMIT_BYTES,
        ),
    )(x2, pe2)
    return out2.reshape(B, T, D)


# ----------------------------- module-equivalent wrapper ---------------------

class RoPositionalEncoding:
    """JAX/Pallas equivalent of the PyTorch RoPositionalEncoding module."""

    def __init__(self, d_embed: int, dropout_rate: float, att_h: int = 4,
                 rope_abs_plus: bool = False, max_len: int = 5000,
                 d_roembed: int = -1):
        self.d_model = d_embed
        self.xscale = math.sqrt(d_embed)
        self.max_len = max_len
        self.dropout_rate = dropout_rate  # identity (eval / rate 0)

        # abs_pe table (1, max_len, d_embed), f32 (kept f32 for in-kernel f32 compute)
        self.abs_pe = get_abs_position(d_embed, max_len)

        if d_roembed < 1:
            assert d_embed % att_h % 2 == 0
            d_roembed = d_embed // att_h
        abs_rope = get_abs_position(d_roembed, max_len)                    # (1, L, d_ro)
        sentinel = d_roembed // 2
        freq = jnp.concatenate(
            [abs_rope[..., 0::2], abs_rope[..., 1::2]], axis=-1
        )                                                                   # sin | cos
        assert freq.shape[-1] == d_roembed and sentinel * 2 == d_roembed
        self.pe = freq                                                      # (1, L, d_ro)
        self.rope_abs_plus = rope_abs_plus

    def forward(self, x: jnp.ndarray, offset: int = 0):
        """x: (batch, time, d_embed). Returns (x_out, pos_emb)."""
        B, T, D = x.shape
        assert offset + T < self.max_len          # matches the PyTorch assert
        assert D == self.d_model

        pos_emb = self.pe[:, offset:offset + T]                            # (1, T, d_ro)

        if self.rope_abs_plus:
            abs_pe_slice = self.abs_pe[:, offset:offset + T]               # (1, T, D) f32
            x_out = _scale_add_pallas(x, abs_pe_slice, self.xscale)
        else:
            x_out = _scale_pallas(x, self.xscale)

        # dropout(x) with rate 0 / eval mode == identity
        # TODO(synk): train-mode stochastic dropout not implemented.
        return x_out, pos_emb


# ----------------------------- demo / check ----------------------------------

if __name__ == "__main__":
    att_h = 4
    max_len = 64
    offset = 3
    key = jax.random.PRNGKey(0)

    ok = True

    # float32 checks:
    #  (2, 8, 32)  -> lane-dense flatten (scale) / 2-D fallback (rope_abs_plus)
    #  (3, 17, 48) -> masked-store fallback paths (n % 128 != 0, D % 128 != 0)
    #  (2, 16, 128)-> 3-D lane+sublane dense rope_abs_plus path
    for (B, T, D) in ((2, 8, 32), (3, 17, 48), (2, 16, 128)):
        x = jax.random.normal(jax.random.fold_in(key, D), (B, T, D), dtype=jnp.float32)
        for rope_abs_plus in (False, True):
            mod = RoPositionalEncoding(
                d_embed=D, dropout_rate=0.0, att_h=att_h,
                rope_abs_plus=rope_abs_plus, max_len=max_len,
            )
            x_out, pos_emb = mod.forward(x, offset=offset)
            x_out = jax.block_until_ready(x_out)
            pos_emb = jax.block_until_ready(pos_emb)

            ref = x * mod.xscale
            if rope_abs_plus:
                ref = ref + mod.abs_pe[:, offset:offset + T]
            ref_pe = mod.pe[:, offset:offset + T]

            ok &= bool(jnp.allclose(x_out, ref, atol=1e-5, rtol=1e-5))
            ok &= bool(jnp.allclose(pos_emb, ref_pe, atol=1e-6, rtol=1e-6))
            ok &= (x_out.shape == (B, T, D)) and (pos_emb.shape == (1, T, D // att_h))

    # bfloat16 checks (f32 in-kernel compute with f32 pe, single rounding at the store)
    for (B, T, D) in ((2, 8, 32), (2, 16, 128)):
        x_bf = jax.random.normal(jax.random.fold_in(key, 1000 + D), (B, T, D),
                                 dtype=jnp.float32).astype(jnp.bfloat16)
        mod = RoPositionalEncoding(d_embed=D, dropout_rate=0.0, att_h=att_h,
                                   rope_abs_plus=True, max_len=max_len)
        x_out, pos_emb = mod.forward(x_bf, offset=offset)
        x_out = jax.block_until_ready(x_out)
        ref_f32 = (x_bf.astype(jnp.float32) * mod.xscale
                   + mod.abs_pe[:, offset:offset + T])
        ok &= (x_out.dtype == jnp.bfloat16)
        ok &= bool(jnp.allclose(x_out.astype(jnp.float32), ref_f32,
                                atol=2e-2, rtol=2e-2))

    if ok:
        print("KERNEL_OK")
    else:
        print("MISMATCH")
</pallas_src>

<mosaic_0001>
module attributes {stable_mosaic.version = 11 : i64} {
  func.func @_scale_kernel(%arg0: i32, %arg1: memref<1x512xf32, #tpu.memory_space<vmem>>, %arg2: memref<1x512xf32, #tpu.memory_space<vmem>>) attributes {dimension_semantics = [#tpu.dimension_semantics<parallel>], iteration_bounds = array<i64: 1>, scalar_prefetch = 0 : i64, scratch_operands = 0 : i64, tpu.core_type = #tpu.core_type<tc>, window_params = [{transform_indices = @transform_0, window_bounds = array<i64: 1, 512>}, {transform_indices = @transform_1, window_bounds = array<i64: 1, 512>}]} {
    %c0 = arith.constant 0 : index
    %c0_0 = arith.constant 0 : index
    %0 = vector.load %arg1[%c0, %c0_0] : memref<1x512xf32, #tpu.memory_space<vmem>>, vector<1x512xf32>
    %cst = arith.constant 5.65685415 : f32
    %1 = vector.broadcast %cst : f32 to vector<1x512xf32>
    %2 = arith.mulf %0, %1 : vector<1x512xf32>
    %c0_1 = arith.constant 0 : index
    %c0_2 = arith.constant 0 : index
    %3 = vector.load %arg2[%c0_1, %c0_2] : memref<1x512xf32, #tpu.memory_space<vmem>>, vector<1x512xf32>
    tpu.vector_store %arg2[%c0_1, %c0_2], %2 {strides = array<i32>} : memref<1x512xf32, #tpu.memory_space<vmem>>, vector<1x512xf32>,
    return
  }
  func.func @transform_0(%arg0: i32) -> (i32, i32) {
    %c0_i32 = arith.constant 0 : i32
    %c0_i32_0 = arith.constant 0 : i32
    return %arg0, %c0_i32 : i32, i32
  }
  func.func @transform_1(%arg0: i32) -> (i32, i32) {
    %c0_i32 = arith.constant 0 : i32
    %c0_i32_0 = arith.constant 0 : i32
    return %arg0, %c0_i32 : i32, i32
  }
}

</mosaic_0001>

<llo_original>
// kernel: tpu_custom_call.1
$region0: #{tpu_custom_call.1}
  #allocation0 [shape = 'u32[]', space=smem, size = 0x4, offset = 0x4, fixed_abs, tag = 'smem constant byte address 0x4 - core index']
  #allocation1 [shape = 'u32[144,128]{1,0:T(1,128)}', space=vmem, size = 0x12000, scoped, tag = 'internal scratch']
  %s0 = inlined_call_operand.hbm [shape: f32[1,512], index: 0, kind: input, shape index: {}]
  %s1 = inlined_call_operand.hbm [shape: f32[1,512], index: 1, kind: output, shape index: {}]
  %s2 = sld [smem:[#allocation0]]
  $region18: #{tpu_custom_call.1} parent=0
    _
  %s4 = ssub.s32 1, %s2
  %s5 = scalar_select 0, %s4, %s2
  $region1: #{tpu_custom_call.1} parent=0
    #allocation2 [shape = 'u8[2048]{0}', space=vmem, size = 0x800, scoped, tag = 'input window, operand 0, single buffered']
    #allocation3 [shape = 's32[1]{0}', space=sflag, size = 0x4, scoped, tag = 'scoped memory for tpu_custom_call.1']
    #allocation4 [shape = 's32[1]{0}', space=sflag, size = 0x4, scoped, tag = 'scoped memory for tpu_custom_call.1']
    #allocation5 [shape = 'u8[2048]{0}', space=vmem, size = 0x800, scoped, tag = 'output window, operand 0, single buffered']
    %6 = vsyncpa [#allocation3], 0
    %7 = vsyncpa [#allocation4], 0
    // Predicated region
    $region2: #{tpu_custom_call.1} parent=1 // pred_check
      _
    $region3: #{tpu_custom_call.1} parent=1 // pred_check_branch
      %9 = sbr.rel (0) target = $region5
    $region4: #{tpu_custom_call.1} parent=1 // pred_region
      %s11 = ssub.s32 64, 64
      %12 = vsyncadd [#allocation3], %s11
      %s14 = sshll.u32 [#allocation2], 4
      %s15 = int_to_ptr.vmem [resolvable:$true] %s14
      %17 = dma.hbm_to_vmem [thread:$0]  %s0, 64, %s15, [#allocation3]
    $region5: #{tpu_custom_call.1} parent=1 // pred_fallthru
      _
    // Predicated region
    $region6: #{tpu_custom_call.1} parent=1 // pred_check
      _
    $region7: #{tpu_custom_call.1} parent=1 // pred_check_branch
      %19 = sbr.rel (0) target = $region9
    $region8: #{tpu_custom_call.1} parent=1 // pred_region
      %20 = dma.done [#allocation3], 64
    $region9: #{tpu_custom_call.1} parent=1 // pred_fallthru
      _
    %v21 = vld [vmem:[#allocation2] sm:$0xf]
    %v22 = vmul.f32 %v21, 5.656854
    %v23 = vlaneseq
    %vm24 = vcmp.ge.s32.totalorder %v23, 0
    %vm25 = vcmp.lt.s32.totalorder %v23, 512
    %vm26 = vmand %vm24, %vm25
    %27 = vst.msk [vmem:[#allocation5] sm:$0xf] %vm26, %v22
    // Predicated region
    $region10: #{tpu_custom_call.1} parent=1 // pred_check
      _
    $region11: #{tpu_custom_call.1} parent=1 // pred_check_branch
      %29 = sbr.rel (0) target = $region13
    $region12: #{tpu_custom_call.1} parent=1 // pred_region
      %s31 = ssub.s32 64, 64
      %32 = vsyncadd [#allocation4], %s31
      %s34 = sshll.u32 [#allocation5], 4
      %s35 = int_to_ptr.vmem [resolvable:$true] %s34
      %37 = dma.vmem_to_hbm [thread:$0]  %s35, 64, %s1, [#allocation4]
    $region13: #{tpu_custom_call.1} parent=1 // pred_fallthru
      _
    // Predicated region
    $region14: #{tpu_custom_call.1} parent=1 // pred_check
      _
    $region15: #{tpu_custom_call.1} parent=1 // pred_check_branch
      %39 = sbr.rel (0) target = $region17
    $region16: #{tpu_custom_call.1} parent=1 // pred_region
      %40 = dma.done [#allocation4], 64
    $region17: #{tpu_custom_call.1} parent=1 // pred_fallthru
      _
    %41 = vsyncpa [#allocation3], 1
    %42 = vsyncpa [#allocation4], 1

</llo_original>
